<compile_context>
chip_gen: v6e
topology: v6e:2x2x1
jax: 0.10.0
libtpu: 0.0.40
codegen_flags: <defaults>
</compile_context>

<pallas_src>
import math

import jax
import jax.numpy as jnp
from jax import lax
from jax.experimental import pallas as pl
from jax.experimental.pallas import tpu as pltpu

SMOOTH_NR = 1e-5
SMOOTH_DR = 1e-5
_PAD_X = -1e4   # exp(-|_PAD_X|) == 0 exactly -> zero contribution to all sums


def _make_mixed_loss_kernel(*, nc_per, T, LW, SR, slab, approx):
    """Kernel over one (T, LW) block of x and t; accumulates into a resident
    (32, LW) block: rows [0:8]=bce, [8:16]=p*t, [16:24]=p, [24:32]=t."""
    n_slabs = T // slab

    def kernel(x_ref, t_ref, acc_ref):
        shard = pl.program_id(0)
        chunk = pl.program_id(2)                 # reduction (chunk) axis

        @pl.when(chunk == 0)
        def _init():
            acc_ref[...] = jnp.zeros_like(acc_ref)

        # Logical (unclamped) first lane-row this grid step covers.  The
        # index_map clamps the DMA to the last valid block; this mask zeroes
        # any over-covered (or clamp-duplicated) rows.
        rows_valid = SR - (shard * nc_per + chunk) * T       # scalar, may be <= 0
        row_iota = lax.broadcasted_iota(jnp.int32, (slab, LW), 0)  # hoisted

        def slab_body(s, carry):
            bce_a, int_a, p_a, t_a = carry
            r0 = s * slab
            x = x_ref[pl.ds(r0, slab), :].astype(jnp.float32)
            t = t_ref[pl.ds(r0, slab), :].astype(jnp.float32)

            valid = row_iota < (rows_valid - r0)
            x = jnp.where(valid, x, _PAD_X)      # masked rows contribute exactly 0
            t = jnp.where(valid, t, 0.0)

            # Shared transcendental: e = exp(-|x|) feeds both the stable BCE
            # softplus and the sigmoid (3 EUP ops / element).
            e = jnp.exp(-jnp.abs(x))
            bce = jnp.maximum(x, 0.0) - x * t + jnp.log1p(e)
            denom = 1.0 + e
            inv = pl.reciprocal(denom, approx=True) if approx else 1.0 / denom
            p = jnp.where(x >= 0.0, inv, e * inv)  # sigmoid(x), no inf/NaN path

            def fold(v):                          # (slab, LW) -> (8, LW), VPU-only
                return jnp.sum(v.reshape(slab // 8, 8, LW), axis=0)

            return (bce_a + fold(bce), int_a + fold(p * t),
                    p_a + fold(p), t_a + fold(t))

        z = jnp.zeros((8, LW), jnp.float32)
        bce_a, int_a, p_a, t_a = lax.fori_loop(
            0, n_slabs, slab_body, (z, z, z, z), unroll=True)

        acc_ref[0:8, :] += bce_a
        acc_ref[8:16, :] += int_a
        acc_ref[16:24, :] += p_a
        acc_ref[24:32, :] += t_a

    return kernel


def mixed_loss(inputs, targets, weight_bce=0.5, weight_dice=0.5, *,
               lane_width=512, block_bytes=8 * 1024 * 1024, slab_rows=128,
               num_shards=None, buffer_count=2, approx_sigmoid=True):
    """inputs/targets: (B, C, *spatial) arrays (any float/int dtype, may differ);
    returns the scalar f32 mixed loss.  block_bytes is the combined (x + t)
    per-step input block budget."""
    assert inputs.shape == targets.shape
    B, C = inputs.shape[0], inputs.shape[1]
    R = B * C
    S = int(math.prod(inputs.shape[2:]))

    x_item = jnp.dtype(inputs.dtype).itemsize
    t_item = jnp.dtype(targets.dtype).itemsize

    # Lane width: prefer the requested width, else the largest multiple of 128
    # dividing S so the (R, S) -> (R, SR, LW) reshape is copy-free.
    LW = lane_width
    if S % LW:
        for cand in (256, 128):
            if cand < LW and S % cand == 0:
                LW = cand
                break

    SR = pl.cdiv(S, LW)                       # lane-rows per (B, C) row

    x2 = jnp.reshape(inputs, (R, S))
    t2 = jnp.reshape(targets, (R, S))
    if S % LW:
        # Sub-LW remainder only (< LW elements/row): pad with (x=-1e4, t=0),
        # which contributes exactly zero to every partial sum.  This is the
        # only case that still costs an HBM copy.
        pad = SR * LW - S
        x2 = jnp.concatenate(
            [x2, jnp.full((R, pad), _PAD_X, dtype=x2.dtype)], axis=1)
        t2 = jnp.concatenate(
            [t2, jnp.zeros((R, pad), dtype=t2.dtype)], axis=1)
    x3 = x2.reshape(R, SR, LW)
    t3 = t2.reshape(R, SR, LW)

    # Rows-per-block (T) and in-kernel slab sizing (sized from BOTH dtypes).
    min_item = min(x_item, t_item)
    gran = max(8, 32 // max(1, min_item))     # sublane packing: 8 f32 / 16 bf16 / 32 int8
    slab = max(gran, (slab_rows // gran) * gran)
    per_row_bytes = LW * (x_item + t_item)
    t_budget = max(gran, block_bytes // per_row_bytes)
    T = min(t_budget, SR)
    if T >= slab:
        T = (T // slab) * slab
    else:
        slab = max(gran, -(-T // gran) * gran)
        T = slab

    nb = pl.cdiv(SR, T)                       # row-blocks per (B, C) row
    if num_shards is None:
        # R >= 2 already provides a >=2-way "parallel" extent for dual-TC
        # chips; otherwise split the spatial axis (cheap on 1-TC chips too).
        num_shards = 1 if R >= 2 else 2
    NP = max(1, min(num_shards, nb))          # spatial shards ("parallel")
    nc_per = pl.cdiv(nb, NP)

    # Clamp the DMA'd block to the last valid block; over-coverage is zeroed
    # in-kernel by the row mask, so no HBM padding is ever needed here.
    in_map = lambda p, r, c: (r, jnp.minimum(p * nc_per + c, nb - 1), 0)
    out_map = lambda p, r, c: (p * R + r, 0, 0)

    def in_spec():
        if buffer_count == 2:
            return pl.BlockSpec((None, T, LW), in_map)
        # Deeper pipelining (e.g. 3) for short-step regimes (v7x).
        return pl.BlockSpec((None, T, LW), in_map,
                            pipeline_mode=pl.Buffered(buffer_count))

    vmem_need = (buffer_count * T * LW * (x_item + t_item)   # input pipeline bufs
                 + 2 * 32 * LW * 4                           # output double buffer
                 + 8 * slab * LW * 4                         # slab temporaries
                 + (4 << 20))                                # headroom
    vmem_limit = int(min(max(vmem_need, 32 << 20), 120 << 20))

    kernel = _make_mixed_loss_kernel(nc_per=nc_per, T=T, LW=LW, SR=SR,
                                     slab=slab, approx=approx_sigmoid)

    acc = pl.pallas_call(
        kernel,
        out_shape=jax.ShapeDtypeStruct((NP * R, 32, LW), jnp.float32),
        grid_spec=pltpu.PrefetchScalarGridSpec(
            num_scalar_prefetch=0,
            grid=(NP, R, nc_per),
            in_specs=[in_spec(), in_spec()],
            out_specs=pl.BlockSpec((None, 32, LW), out_map),
        ),
        compiler_params=pltpu.CompilerParams(
            dimension_semantics=("parallel", "parallel", "arbitrary"),
            vmem_limit_bytes=vmem_limit),
        cost_estimate=pl.CostEstimate(
            flops=int(18 * R * SR * LW),
            transcendentals=int(3 * R * SR * LW),
            bytes_accessed=int(R * SR * LW * (x_item + t_item)
                               + NP * R * 32 * LW * 4)),
    )(x3, t3)

    # Tiny JAX epilogue: cross-lane/shard reductions + bce/dice formulas.
    acc = acc.reshape(NP, R, 4, 8, LW)
    per_row = jnp.sum(acc, axis=(0, 3, 4))         # (R, 4)
    bce_loss = jnp.sum(per_row[:, 0]) / float(R * S)   # exact element count
    inter, psum, tsum = per_row[:, 1], per_row[:, 2], per_row[:, 3]
    dice = 1.0 - (2.0 * inter + SMOOTH_NR) / (psum + tsum + SMOOTH_DR)
    return weight_bce * bce_loss + weight_dice * jnp.mean(dice)


def _reference_mixed_loss(x, t, weight_bce=0.5, weight_dice=0.5):
    x = x.astype(jnp.float32)
    t = t.astype(jnp.float32)
    bce = jnp.mean(jnp.maximum(x, 0.0) - x * t + jnp.log1p(jnp.exp(-jnp.abs(x))))
    p = jax.nn.sigmoid(x)
    axes = tuple(range(2, x.ndim))
    inter = jnp.sum(p * t, axes)
    po = jnp.sum(p, axes)
    to = jnp.sum(t, axes)
    dice = jnp.mean(1.0 - (2.0 * inter + SMOOTH_NR) / (po + to + SMOOTH_DR))
    return weight_bce * bce + weight_dice * dice


if __name__ == "__main__":
    key = jax.random.PRNGKey(0)
    ks = jax.random.split(key, 12)

    def run_case(shape, kx, kt, x_dtype=jnp.float32, tol=1e-5, **kwargs):
        x = jax.random.normal(kx, shape, dtype=jnp.float32).astype(x_dtype)
        t = (jax.random.uniform(kt, shape) > 0.5).astype(jnp.float32)
        out = jax.block_until_ready(mixed_loss(x, t, **kwargs))
        ref = jax.block_until_ready(_reference_mixed_loss(x, t))
        assert jnp.allclose(out, ref, rtol=tol, atol=tol), (shape, kwargs, out, ref)
        return x, t

    # Case 1: aligned single-channel volume; exact sigmoid (tight tol) and the
    # default approx-reciprocal sigmoid (loose tol: ~1e-4 relative on sigmoid).
    x1, t1 = run_case((2, 1, 8, 16, 16), ks[0], ks[1], approx_sigmoid=False)
    out1 = jax.block_until_ready(mixed_loss(x1, t1))
    ref1 = jax.block_until_ready(_reference_mixed_loss(x1, t1))
    assert jnp.allclose(out1, ref1, rtol=1e-2, atol=1e-2), (out1, ref1)

    # Case 2: ragged spatial size (sub-lane-width pad + in-kernel row mask).
    run_case((2, 1, 7, 15, 13), ks[2], ks[3], approx_sigmoid=False)

    # Case 3: small blocks force multiple chunks, 2 spatial shards (B*C == 1),
    # a clamped over-covered block and a partial tail block.
    run_case((1, 1, 16, 32, 64), ks[4], ks[5], approx_sigmoid=False,
             block_bytes=96 * 1024)

    # Case 4: bf16 logits + f32 targets (mixed dtypes, 16-row sublane packing).
    run_case((2, 2, 8, 16, 32), ks[6], ks[7], x_dtype=jnp.bfloat16,
             approx_sigmoid=False)

    # Case 5: lane-width fallback to 128 (S divisible by 128 but not 512).
    run_case((1, 1, 4, 8, 12), ks[8], ks[9], approx_sigmoid=False)

    # Case 6: multi-slab unrolled inner loop + 2 spatial shards.
    run_case((1, 1, 32, 64, 64), ks[10], ks[11], approx_sigmoid=False,
             block_bytes=512 * 1024, slab_rows=64)

    print("KERNEL_OK")
</pallas_src>

<mosaic_0001>
module attributes {stable_mosaic.version = 11 : i64} {
  func.func @kernel(%arg0: i32, %arg1: i32, %arg2: i32, %arg3: memref<1x8x512xf32, #tpu.memory_space<vmem>>, %arg4: memref<1x8x512xf32, #tpu.memory_space<vmem>>, %arg5: memref<1x32x512xf32, #tpu.memory_space<vmem>>) attributes {dimension_semantics = [#tpu.dimension_semantics<parallel>, #tpu.dimension_semantics<parallel>, #tpu.dimension_semantics<arbitrary>], iteration_bounds = array<i64: 1, 2, 1>, scalar_prefetch = 0 : i64, scratch_operands = 0 : i64, tpu.core_type = #tpu.core_type<tc>, window_params = [{transform_indices = @transform_0, window_bounds = array<i64: 1, 8, 512>}, {transform_indices = @transform_1, window_bounds = array<i64: 1, 8, 512>}, {transform_indices = @transform_2, window_bounds = array<i64: 1, 32, 512>}]} {
    %c0_i32 = arith.constant 0 : i32
    %0 = arith.cmpi eq, %arg2, %c0_i32 : i32
    %1 = arith.extui %0 : i1 to i32
    %c0_i32_0 = arith.constant 0 : i32
    %2 = arith.cmpi ne, %1, %c0_i32_0 : i32
    scf.if %2 {
      %cst_39 = arith.constant 0.000000e+00 : f32
      %78 = vector.broadcast %cst_39 : f32 to vector<32x512xf32>
      %c0_40 = arith.constant 0 : index
      %c0_41 = arith.constant 0 : index
      %c0_42 = arith.constant 0 : index
      %79 = vector.load %arg5[%c0_40, %c0_41, %c0_42] : memref<1x32x512xf32, #tpu.memory_space<vmem>>, vector<1x32x512xf32>
      %80 = vector.shape_cast %79 : vector<1x32x512xf32> to vector<32x512xf32>
      %81 = vector.shape_cast %78 : vector<32x512xf32> to vector<1x32x512xf32>
      tpu.vector_store %arg5[%c0_40, %c0_41, %c0_42], %81 {strides = array<i32>} : memref<1x32x512xf32, #tpu.memory_space<vmem>>, vector<1x32x512xf32>,
    } else {
    }
    %c1_i32 = arith.constant 1 : i32
    %3 = arith.muli %arg0, %c1_i32 : i32
    %4 = arith.addi %3, %arg2 : i32
    %c8_i32 = arith.constant 8 : i32
    %5 = arith.muli %4, %c8_i32 : i32
    %c4_i32 = arith.constant 4 : i32
    %6 = arith.subi %c4_i32, %5 : i32
    %7 = tpu.iota {dimensions = array<i32: 0>} : vector<8x512xi32>
    %cst = arith.constant 0.000000e+00 : f32
    %8 = vector.broadcast %cst : f32 to vector<8x512xf32>
    %c0_i32_1 = arith.constant 0 : i32
    %c8_i32_2 = arith.constant 8 : i32
    %9 = arith.muli %c0_i32_1, %c8_i32_2 : i32
    %c0 = arith.constant 0 : index
    %10 = arith.index_cast %9 : i32 to index
    %c0_3 = arith.constant 0 : index
    %11 = vector.load %arg3[%c0, %10, %c0_3] : memref<1x8x512xf32, #tpu.memory_space<vmem>>, vector<1x8x512xf32>
    %12 = vector.shape_cast %11 : vector<1x8x512xf32> to vector<8x512xf32>
    %c0_4 = arith.constant 0 : index
    %13 = arith.index_cast %9 : i32 to index
    %c0_5 = arith.constant 0 : index
    %14 = vector.load %arg4[%c0_4, %13, %c0_5] : memref<1x8x512xf32, #tpu.memory_space<vmem>>, vector<1x8x512xf32>
    %15 = vector.shape_cast %14 : vector<1x8x512xf32> to vector<8x512xf32>
    %16 = arith.subi %6, %9 : i32
    %17 = vector.broadcast %16 : i32 to vector<8x512xi32>
    %18 = arith.cmpi slt, %7, %17 : vector<8x512xi32>
    %cst_6 = arith.constant -1.000000e+04 : f32
    %19 = vector.broadcast %cst_6 : f32 to vector<8x512xf32>
    %20 = arith.select %18, %12, %19 : vector<8x512xi1>, vector<8x512xf32>
    %cst_7 = arith.constant 0.000000e+00 : f32
    %21 = vector.broadcast %cst_7 : f32 to vector<8x512xf32>
    %22 = arith.select %18, %15, %21 : vector<8x512xi1>, vector<8x512xf32>
    %23 = math.absf %20 : vector<8x512xf32>
    %cst_8 = arith.constant 0.000000e+00 : f32
    %24 = vector.broadcast %cst_8 : f32 to vector<8x512xf32>
    %25 = arith.subf %24, %23 : vector<8x512xf32>
    %26 = math.exp %25 : vector<8x512xf32>
    %cst_9 = arith.constant 0.000000e+00 : f32
    %27 = vector.broadcast %cst_9 : f32 to vector<8x512xf32>
    %28 = arith.maximumf %20, %27 : vector<8x512xf32>
    %29 = arith.mulf %20, %22 : vector<8x512xf32>
    %30 = arith.subf %28, %29 : vector<8x512xf32>
    %31 = math.log1p %26 : vector<8x512xf32>
    %32 = arith.addf %30, %31 : vector<8x512xf32>
    %cst_10 = arith.constant 1.000000e+00 : f32
    %33 = vector.broadcast %cst_10 : f32 to vector<8x512xf32>
    %34 = arith.addf %33, %26 : vector<8x512xf32>
    %cst_11 = arith.constant 1.000000e+00 : f32
    %35 = vector.broadcast %cst_11 : f32 to vector<8x512xf32>
    %36 = arith.divf %35, %34 : vector<8x512xf32>
    %cst_12 = arith.constant 0.000000e+00 : f32
    %37 = vector.broadcast %cst_12 : f32 to vector<8x512xf32>
    %38 = arith.cmpf oge, %20, %37 : vector<8x512xf32>
    %39 = arith.mulf %26, %36 : vector<8x512xf32>
    %40 = arith.select %38, %36, %39 : vector<8x512xi1>, vector<8x512xf32>
    %41 = vector.shape_cast %32 : vector<8x512xf32> to vector<1x8x512xf32>
    %cst_13 = arith.constant dense<0.000000e+00> : vector<8x512xf32>
    %42 = vector.multi_reduction <add>, %41, %cst_13 [0] : vector<1x8x512xf32> to vector<8x512xf32>
    %43 = arith.addf %8, %42 : vector<8x512xf32>
    %44 = arith.mulf %40, %22 : vector<8x512xf32>
    %45 = vector.shape_cast %44 : vector<8x512xf32> to vector<1x8x512xf32>
    %cst_14 = arith.constant dense<0.000000e+00> : vector<8x512xf32>
    %46 = vector.multi_reduction <add>, %45, %cst_14 [0] : vector<1x8x512xf32> to vector<8x512xf32>
    %47 = arith.addf %8, %46 : vector<8x512xf32>
    %48 = vector.shape_cast %40 : vector<8x512xf32> to vector<1x8x512xf32>
    %cst_15 = arith.constant dense<0.000000e+00> : vector<8x512xf32>
    %49 = vector.multi_reduction <add>, %48, %cst_15 [0] : vector<1x8x512xf32> to vector<8x512xf32>
    %50 = arith.addf %8, %49 : vector<8x512xf32>
    %51 = vector.shape_cast %22 : vector<8x512xf32> to vector<1x8x512xf32>
    %cst_16 = arith.constant dense<0.000000e+00> : vector<8x512xf32>
    %52 = vector.multi_reduction <add>, %51, %cst_16 [0] : vector<1x8x512xf32> to vector<8x512xf32>
    %53 = arith.addf %8, %52 : vector<8x512xf32>
    %c1_i32_17 = arith.constant 1 : i32
    %c0_18 = arith.constant 0 : index
    %c0_19 = arith.constant 0 : index
    %c0_20 = arith.constant 0 : index
    %54 = vector.load %arg5[%c0_18, %c0_19, %c0_20] : memref<1x32x512xf32, #tpu.memory_space<vmem>>, vector<1x8x512xf32>
    %55 = vector.shape_cast %54 : vector<1x8x512xf32> to vector<8x512xf32>
    %56 = arith.addf %55, %43 : vector<8x512xf32>
    %c0_21 = arith.constant 0 : index
    %c0_22 = arith.constant 0 : index
    %c0_23 = arith.constant 0 : index
    %57 = vector.load %arg5[%c0_21, %c0_22, %c0_23] : memref<1x32x512xf32, #tpu.memory_space<vmem>>, vector<1x8x512xf32>
    %58 = vector.shape_cast %57 : vector<1x8x512xf32> to vector<8x512xf32>
    %59 = vector.shape_cast %56 : vector<8x512xf32> to vector<1x8x512xf32>
    tpu.vector_store %arg5[%c0_21, %c0_22, %c0_23], %59 {strides = array<i32>} : memref<1x32x512xf32, #tpu.memory_space<vmem>>, vector<1x8x512xf32>,
    %c0_24 = arith.constant 0 : index
    %c8 = arith.constant 8 : index
    %c0_25 = arith.constant 0 : index
    %60 = vector.load %arg5[%c0_24, %c8, %c0_25] : memref<1x32x512xf32, #tpu.memory_space<vmem>>, vector<1x8x512xf32>
    %61 = vector.shape_cast %60 : vector<1x8x512xf32> to vector<8x512xf32>
    %62 = arith.addf %61, %47 : vector<8x512xf32>
    %c0_26 = arith.constant 0 : index
    %c8_27 = arith.constant 8 : index
    %c0_28 = arith.constant 0 : index
    %63 = vector.load %arg5[%c0_26, %c8_27, %c0_28] : memref<1x32x512xf32, #tpu.memory_space<vmem>>, vector<1x8x512xf32>
    %64 = vector.shape_cast %63 : vector<1x8x512xf32> to vector<8x512xf32>
    %65 = vector.shape_cast %62 : vector<8x512xf32> to vector<1x8x512xf32>
    tpu.vector_store %arg5[%c0_26, %c8_27, %c0_28], %65 {strides = array<i32>} : memref<1x32x512xf32, #tpu.memory_space<vmem>>, vector<1x8x512xf32>,
    %c0_29 = arith.constant 0 : index
    %c16 = arith.constant 16 : index
    %c0_30 = arith.constant 0 : index
    %66 = vector.load %arg5[%c0_29, %c16, %c0_30] : memref<1x32x512xf32, #tpu.memory_space<vmem>>, vector<1x8x512xf32>
    %67 = vector.shape_cast %66 : vector<1x8x512xf32> to vector<8x512xf32>
    %68 = arith.addf %67, %50 : vector<8x512xf32>
    %c0_31 = arith.constant 0 : index
    %c16_32 = arith.constant 16 : index
    %c0_33 = arith.constant 0 : index
    %69 = vector.load %arg5[%c0_31, %c16_32, %c0_33] : memref<1x32x512xf32, #tpu.memory_space<vmem>>, vector<1x8x512xf32>
    %70 = vector.shape_cast %69 : vector<1x8x512xf32> to vector<8x512xf32>
    %71 = vector.shape_cast %68 : vector<8x512xf32> to vector<1x8x512xf32>
    tpu.vector_store %arg5[%c0_31, %c16_32, %c0_33], %71 {strides = array<i32>} : memref<1x32x512xf32, #tpu.memory_space<vmem>>, vector<1x8x512xf32>,
    %c0_34 = arith.constant 0 : index
    %c24 = arith.constant 24 : index
    %c0_35 = arith.constant 0 : index
    %72 = vector.load %arg5[%c0_34, %c24, %c0_35] : memref<1x32x512xf32, #tpu.memory_space<vmem>>, vector<1x8x512xf32>
    %73 = vector.shape_cast %72 : vector<1x8x512xf32> to vector<8x512xf32>
    %74 = arith.addf %73, %53 : vector<8x512xf32>
    %c0_36 = arith.constant 0 : index
    %c24_37 = arith.constant 24 : index
    %c0_38 = arith.constant 0 : index
    %75 = vector.load %arg5[%c0_36, %c24_37, %c0_38] : memref<1x32x512xf32, #tpu.memory_space<vmem>>, vector<1x8x512xf32>
    %76 = vector.shape_cast %75 : vector<1x8x512xf32> to vector<8x512xf32>
    %77 = vector.shape_cast %74 : vector<8x512xf32> to vector<1x8x512xf32>
    tpu.vector_store %arg5[%c0_36, %c24_37, %c0_38], %77 {strides = array<i32>} : memref<1x32x512xf32, #tpu.memory_space<vmem>>, vector<1x8x512xf32>,
    return
  }
  func.func @transform_0(%arg0: i32, %arg1: i32, %arg2: i32) -> (i32, i32, i32) {
    %c1_i32 = arith.constant 1 : i32
    %0 = arith.muli %arg0, %c1_i32 : i32
    %1 = arith.addi %0, %arg2 : i32
    %c0_i32 = arith.constant 0 : i32
    %2 = arith.minsi %1, %c0_i32 : i32
    %c0_i32_0 = arith.constant 0 : i32
    %c0_i32_1 = arith.constant 0 : i32
    return %arg1, %2, %c0_i32_0 : i32, i32, i32
  }
  func.func @transform_1(%arg0: i32, %arg1: i32, %arg2: i32) -> (i32, i32, i32) {
    %c1_i32 = arith.constant 1 : i32
    %0 = arith.muli %arg0, %c1_i32 : i32
    %1 = arith.addi %0, %arg2 : i32
    %c0_i32 = arith.constant 0 : i32
    %2 = arith.minsi %1, %c0_i32 : i32
    %c0_i32_0 = arith.constant 0 : i32
    %c0_i32_1 = arith.constant 0 : i32
    return %arg1, %2, %c0_i32_0 : i32, i32, i32
  }
  func.func @transform_2(%arg0: i32, %arg1: i32, %arg2: i32) -> (i32, i32, i32) {
    %c2_i32 = arith.constant 2 : i32
    %0 = arith.muli %arg0, %c2_i32 : i32
    %1 = arith.addi %0, %arg1 : i32
    %c0_i32 = arith.constant 0 : i32
    %c0_i32_0 = arith.constant 0 : i32
    %c0_i32_1 = arith.constant 0 : i32
    return %1, %c0_i32, %c0_i32_0 : i32, i32, i32
  }
}

</mosaic_0001>

<llo_original>
// kernel: tpu_custom_call.1
$region0: #{tpu_custom_call.1}
  #allocation0 [shape = 'u32[]', space=smem, size = 0x4, offset = 0x4, fixed_abs, tag = 'smem constant byte address 0x4 - core index']
  #allocation1 [shape = 'u32[144,128]{1,0:T(1,128)}', space=vmem, size = 0x12000, scoped, tag = 'internal scratch']
  %s0 = inlined_call_operand.hbm [shape: f32[2,4,512], index: 0, kind: input, shape index: {}]
  %s1 = inlined_call_operand.hbm [shape: f32[2,4,512], index: 1, kind: input, shape index: {}]
  %s2 = inlined_call_operand.hbm [shape: f32[2,32,512], index: 2, kind: output, shape index: {}]
  %s3 = sld [smem:[#allocation0]]
  $region53: #{tpu_custom_call.1} parent=0
    _
  %s5 = ssub.s32 1, %s3
  %s6 = scalar_select 0, %s5, %s3
  $region1: #{tpu_custom_call.1} parent=0
    #allocation2 [shape = 'u8[32768]{0}', space=vmem, size = 0x8000, scoped, tag = 'input window, operand 0']
    #allocation3 [shape = 's32[2]{0}', space=sflag, size = 0x8, scoped, tag = 'scoped memory for tpu_custom_call.1']
    #allocation4 [shape = 's32[2]{0}', space=sflag, size = 0x8, scoped, tag = 'scoped memory for tpu_custom_call.1']
    #allocation5 [shape = 'u8[32768]{0}', space=vmem, size = 0x8000, scoped, tag = 'input window, operand 1']
    #allocation6 [shape = 's32[2]{0}', space=sflag, size = 0x8, scoped, tag = 'scoped memory for tpu_custom_call.1']
    #allocation7 [shape = 'u8[131072]{0}', space=vmem, size = 0x20000, scoped, tag = 'output window, operand 0']
    %7 = vsyncpa [#allocation3], 0
    %s8 = scalar_lea.sflag [#allocation3], 1
    %9 = vsyncpa %s8, 0
    %10 = vsyncpa [#allocation6], 0
    %s11 = scalar_lea.sflag [#allocation6], 1
    %12 = vsyncpa %s11, 0
    %13 = vsyncpa [#allocation4], 0
    %s14 = scalar_lea.sflag [#allocation4], 1
    %15 = vsyncpa %s14, 0
    loop: start=0, step=1, limit=4
    $region2: #{tpu_custom_call.1} parent=1 // loop_pre_header
      _
    $region3: #{tpu_custom_call.1} parent=1 // loop_header
      %s17 = sphi 0, %s21
      %p18 = scmp.ge.s32.totalorder %s17, 4
      %s24 = sphi 0, %s43
      %s25 = sphi 0, %s39
      %s26 = sphi 0, %s35
      %s27 = sphi 0, %s24
      %s28 = sphi 0, %s25
      %s29 = sphi 0, %s26
      %s30 = sphi 0, %s27
      %s31 = sphi 0, %s28
      %s32 = sphi 0, %s29
      %s54 = sphi 0, %s56
      %s57 = sphi 0, %s54
      %s58 = sphi 0, %s57
      %s74 = sphi 0, %s58
      %s88 = sphi 0, %s90
      %s91 = sphi 0, %s88
      %s92 = sphi 0, %s91
      %s108 = sphi 0, %s92
      %s118 = sphi 0, %s120
      %s121 = sphi 0, %s118
      %s122 = sphi 0, %s121
      %s138 = sphi 0, %s122
    $region4: #{tpu_custom_call.1} parent=1 // loop_header_branch
      %20 = sbr.rel (%p18) target = $region8
    $region5: #{tpu_custom_call.1} parent=1 // loop_body
      %s22 = ssub.s32 %s17, 1
      %s23 = ssub.s32 %s17, 2
      %s33 = sadd.s32 1, %s26
      %p34 = scmp.ge.s32.totalorder %s33, 1
      %s35 = scalar_select %p34, 0, %s33
      %s36 = sadd.s32 1, %s25
      %s37 = scalar_select %p34, %s36, %s25
      %p38 = scmp.ge.s32.totalorder %s37, 2
      %s39 = scalar_select %p38, 0, %s37
      %s40 = sadd.s32 1, %s24
      %s41 = scalar_select %p38, %s40, %s24
      %p42 = scmp.ge.s32.totalorder %s41, 1
      %s43 = scalar_select %p42, 0, %s41
      %s44 = sadd.s32 %s24, %s26
      %p45 = scmp.lt.s32.totalorder %s44, 0
      %s46 = scalar_select %p45, %s44, 0
      %s47 = sadd.s32 %s43, %s35
      %p48 = scmp.lt.s32.totalorder %s47, 0
      %s49 = scalar_select %p48, %s47, 0
      %s50 = ssub.s32 %s25, %s39
      %s51 = ssub.s32 %s46, %s49
      %s52 = sor.u32 %s50, %s51
      %p53 = scmp.eq.s32.totalorder %s52, 0
      %s55 = sadd.s32 %s54, 1
      %s56 = scalar_select %p53, %s54, %s55
      %p59 = pneg %p53
      %p60 = scmp.eq.s32.totalorder %s17, 1
      %p61 = por %p59, %p60
      %p62 = scmp.ne.s32.totalorder %s54, %s57
      %p63 = scmp.eq.s32.totalorder %s17, 0
      %p64 = por %p62, %p63
      %p65 = scmp.ne.s32.totalorder %s54, %s57
      %p66 = scmp.eq.s32.totalorder %s22, 1
      %p67 = por %p65, %p66
      %p68 = scmp.ne.s32.totalorder %s57, %s58
      %p69 = scmp.eq.s32.totalorder %s22, 0
      %p70 = por %p68, %p69
      %p71 = scmp.ne.s32.totalorder %s57, %s58
      %p72 = scmp.eq.s32.totalorder %s23, 1
      %p73 = por %p71, %p72
      %p75 = scmp.ne.s32.totalorder %s58, %s74
      %p76 = scmp.eq.s32.totalorder %s23, 0
      %p77 = por %p75, %p76
      %s78 = sadd.s32 %s24, %s26
      %p79 = scmp.lt.s32.totalorder %s78, 0
      %s80 = scalar_select %p79, %s78, 0
      %s81 = sadd.s32 %s43, %s35
      %p82 = scmp.lt.s32.totalorder %s81, 0
      %s83 = scalar_select %p82, %s81, 0
      %s84 = ssub.s32 %s25, %s39
      %s85 = ssub.s32 %s80, %s83
      %s86 = sor.u32 %s84, %s85
      %p87 = scmp.eq.s32.totalorder %s86, 0
      %s89 = sadd.s32 %s88, 1
      %s90 = scalar_select %p87, %s88, %s89
      %p93 = pneg %p87
      %p94 = scmp.eq.s32.totalorder %s17, 1
      %p95 = por %p93, %p94
      %p96 = scmp.ne.s32.totalorder %s88, %s91
      %p97 = scmp.eq.s32.totalorder %s17, 0
      %p98 = por %p96, %p97
      %p99 = scmp.ne.s32.totalorder %s88, %s91
      %p100 = scmp.eq.s32.totalorder %s22, 1
      %p101 = por %p99, %p100
      %p102 = scmp.ne.s32.totalorder %s91, %s92
      %p103 = scmp.eq.s32.totalorder %s22, 0
      %p104 = por %p102, %p103
      %p105 = scmp.ne.s32.totalorder %s91, %s92
      %p106 = scmp.eq.s32.totalorder %s23, 1
      %p107 = por %p105, %p106
      %p109 = scmp.ne.s32.totalorder %s92, %s108
      %p110 = scmp.eq.s32.totalorder %s23, 0
      %p111 = por %p109, %p110
      %s112 = smul.u32 %s24, 2
      %s113 = sadd.s32 %s112, %s25
      %s114 = smul.u32 %s43, 2
      %s115 = sadd.s32 %s114, %s39
      %s116 = ssub.s32 %s113, %s115
      %p117 = scmp.eq.s32.totalorder %s116, 0
      %s119 = sadd.s32 %s118, 1
      %s120 = scalar_select %p117, %s118, %s119
      %p123 = pneg %p117
      %p124 = scmp.eq.s32.totalorder %s17, 1
      %p125 = por %p123, %p124
      %p126 = scmp.ne.s32.totalorder %s118, %s121
      %p127 = scmp.eq.s32.totalorder %s17, 0
      %p128 = por %p126, %p127
      %p129 = scmp.ne.s32.totalorder %s118, %s121
      %p130 = scmp.eq.s32.totalorder %s22, 1
      %p131 = por %p129, %p130
      %p132 = scmp.ne.s32.totalorder %s121, %s122
      %p133 = scmp.eq.s32.totalorder %s22, 0
      %p134 = por %p132, %p133
      %p135 = scmp.ne.s32.totalorder %s121, %s122
      %p136 = scmp.eq.s32.totalorder %s23, 1
      %p137 = por %p135, %p136
      %p139 = scmp.ne.s32.totalorder %s122, %s138
      %p140 = scmp.eq.s32.totalorder %s23, 0
      %p141 = por %p139, %p140
      %p142 = scmp.le.s32.totalorder 1, %s17
      %p143 = scmp.lt.s32.totalorder %s17, 3
      %p144 = pnand %p142, %p143
      %p145 = pneg %p144
      // Predicated region
      $region9: #{tpu_custom_call.1} parent=5 // pred_check
        _
      $region10: #{tpu_custom_call.1} parent=5 // pred_check_branch
        %147 = sbr.rel (%p144) target = $region12
      $region11: #{tpu_custom_call.1} parent=5 // pred_region
        %s148 = ssub.s32 %s17, 1
      $region12: #{tpu_custom_call.1} parent=5 // pred_fallthru
        _
      %p149 = scmp.lt.s32.totalorder %s17, 2
      // Predicated region
      $region13: #{tpu_custom_call.1} parent=5 // pred_check
        %p150 = pneg %p149
      $region14: #{tpu_custom_call.1} parent=5 // pred_check_branch
        %152 = sbr.rel (%p150) target = $region16
      $region15: #{tpu_custom_call.1} parent=5 // pred_region
        // Predicated region
        $region17: #{tpu_custom_call.1} parent=15 // pred_check
          %p153 = pneg %p64
        $region18: #{tpu_custom_call.1} parent=15 // pred_check_branch
          %155 = sbr.rel (%p153) target = $region20
        $region19: #{tpu_custom_call.1} parent=15 // pred_region
          %s156 = sand.u32 %s54, 1
          %s157 = scalar_lea.sflag [#allocation3], %s156
          %s158 = sand.u32 %s54, 1
          %s159 = smul.addr %s158, 32
          %s160 = scalar_lea.vmem [#allocation2], %s159
          %s161 = sadd.s32 %s24, %s26
          %p162 = scmp.lt.s32.totalorder %s161, 0
          %s163 = scalar_select %p162, %s161, 0
          %s164 = smul.u32 2, %s163
          %s165 = ssub.s32 1, %s164
          %s166 = smul.u32 64, %s165
          %s167 = smul.u32 %s166, 4
          %s169 = ssub.s32 512, %s167
          %170 = vsyncadd %s157, %s169
          %p171 = scmp.ne.s32.totalorder 0, %s167
          %s172 = smul.addr %s164, 4
          %s173 = smul.addr %s25, 4
          %s174 = sadd.s32 %s172, %s173
          %s175 = smul.addr %s174, 64
          %s176 = scalar_lea.hbm %s0, %s175
          %s177 = smul.u32 16, %s165
          %s178 = sshll.u32 %s160, 4
          %s179 = int_to_ptr.vmem [resolvable:$true] %s178
          %s180 = sshll.u32 %s177, 4
          %184 = dma.hbm_to_vmem [thread:$0]  (%p171), %s176, %s180, %s179, %s157, 256, 256, 16
        $region20: #{tpu_custom_call.1} parent=15 // pred_fallthru
          _
        // Predicated region
        $region21: #{tpu_custom_call.1} parent=15 // pred_check
          %p185 = pneg %p98
        $region22: #{tpu_custom_call.1} parent=15 // pred_check_branch
          %187 = sbr.rel (%p185) target = $region24
        $region23: #{tpu_custom_call.1} parent=15 // pred_region
          %s188 = sand.u32 %s88, 1
          %s189 = scalar_lea.sflag [#allocation6], %s188
          %s190 = sand.u32 %s88, 1
          %s191 = smul.addr %s190, 32
          %s192 = scalar_lea.vmem [#allocation5], %s191
          %s193 = sadd.s32 %s24, %s26
          %p194 = scmp.lt.s32.totalorder %s193, 0
          %s195 = scalar_select %p194, %s193, 0
          %s196 = smul.u32 2, %s195
          %s197 = ssub.s32 1, %s196
          %s198 = smul.u32 64, %s197
          %s199 = smul.u32 %s198, 4
          %s201 = ssub.s32 512, %s199
          %202 = vsyncadd %s189, %s201
          %p203 = scmp.ne.s32.totalorder 0, %s199
          %s204 = smul.addr %s196, 4
          %s205 = smul.addr %s25, 4
          %s206 = sadd.s32 %s204, %s205
          %s207 = smul.addr %s206, 64
          %s208 = scalar_lea.hbm %s1, %s207
          %s209 = smul.u32 16, %s197
          %s210 = sshll.u32 %s192, 4
          %s211 = int_to_ptr.vmem [resolvable:$true] %s210
          %s212 = sshll.u32 %s209, 4
          %216 = dma.hbm_to_vmem [thread:$0]  (%p203), %s208, %s212, %s211, %s189, 256, 256, 16
        $region24: #{tpu_custom_call.1} parent=15 // pred_fallthru
          _
      $region16: #{tpu_custom_call.1} parent=5 // pred_fallthru
        _
      %p217 = scmp.le.s32.totalorder 1, %s17
      %p218 = scmp.lt.s32.totalorder %s17, 3
      %p219 = pnand %p217, %p218
      %p220 = pneg %p219
      // Predicated region
      $region25: #{tpu_custom_call.1} parent=5 // pred_check
        _
      $region26: #{tpu_custom_call.1} parent=5 // pred_check_branch
        %222 = sbr.rel (%p219) target = $region28
      $region27: #{tpu_custom_call.1} parent=5 // pred_region
        %s223 = ssub.s32 %s17, 1
        %s224 = sand.u32 %s57, 1
        %s225 = scalar_lea.sflag [#allocation3], %s224
        %s226 = sand.u32 %s57, 1
        %s227 = smul.addr %s226, 32
        %s228 = scalar_lea.vmem [#allocation2], %s227
        // Predicated region
        $region29: #{tpu_custom_call.1} parent=27 // pred_check
          %p229 = pneg %p70
        $region30: #{tpu_custom_call.1} parent=27 // pred_check_branch
          %231 = sbr.rel (%p229) target = $region32
        $region31: #{tpu_custom_call.1} parent=27 // pred_region
          %232 = dma.done %s225, 512
        $region32: #{tpu_custom_call.1} parent=27 // pred_fallthru
          _
        %s233 = sand.u32 %s91, 1
        %s234 = scalar_lea.sflag [#allocation6], %s233
        %s235 = sand.u32 %s91, 1
        %s236 = smul.addr %s235, 32
        %s237 = scalar_lea.vmem [#allocation5], %s236
        // Predicated region
        $region33: #{tpu_custom_call.1} parent=27 // pred_check
          %p238 = pneg %p104
        $region34: #{tpu_custom_call.1} parent=27 // pred_check_branch
          %240 = sbr.rel (%p238) target = $region36
        $region35: #{tpu_custom_call.1} parent=27 // pred_region
          %241 = dma.done %s234, 512
        $region36: #{tpu_custom_call.1} parent=27 // pred_fallthru
          _
        %s242 = sand.u32 %s57, 1
        %s243 = scalar_lea.sflag [#allocation3], %s242
        %s244 = sand.u32 %s57, 1
        %s245 = smul.addr %s244, 32
        %s246 = scalar_lea.vmem [#allocation2], %s245
        %p247 = pneg %p70
        %p248 = pneg %p67
        %s249 = sand.u32 %s91, 1
        %s250 = scalar_lea.sflag [#allocation6], %s249
        %s251 = sand.u32 %s91, 1
        %s252 = smul.addr %s251, 32
        %s253 = scalar_lea.vmem [#allocation5], %s252
        %p254 = pneg %p104
        %p255 = pneg %p101
        %p256 = pneg %p134
        %p257 = pneg %p131
        %s258 = sand.u32 %s121, 1
        %s259 = scalar_lea.sflag [#allocation4], %s258
        %s260 = sand.u32 %s121, 1
        %s261 = smul.addr %s260, 128
        %s262 = scalar_lea.vmem [#allocation7], %s261
        %s263 = sadd.s32 %s27, %s29
        %p264 = scmp.lt.s32.totalorder %s263, 0
        %s265 = scalar_select %p264, %s263, 0
        %s266 = smul.u32 2, %s265
        %s267 = ssub.s32 1, %s266
        %s268 = smul.u32 64, %s267
        %s269 = smul.u32 %s268, 4
        %s270 = sadd.s32 %s27, %s29
        %p271 = scmp.lt.s32.totalorder %s270, 0
        %s272 = scalar_select %p271, %s270, 0
        %s273 = smul.u32 2, %s272
        %s274 = ssub.s32 1, %s273
        %s275 = smul.u32 64, %s274
        %s276 = smul.u32 %s275, 4
        %s277 = smul.u32 %s27, 2
        %s278 = sadd.s32 %s277, %s28
        %p279 = scmp.eq.s32.totalorder %s29, 0
        // Predicated region
        $region37: #{tpu_custom_call.1} parent=27 // pred_check
          %p280 = pneg %p279
        $region38: #{tpu_custom_call.1} parent=27 // pred_check_branch
          %282 = sbr.rel (%p280) target = $region40
        $region39: #{tpu_custom_call.1} parent=27 // pred_region
          %283 = vst [vmem:[%s262] sm:$0xff] 0.0
          %284 = vst [vmem:[%s262 + $0x8] sm:$0xff] 0.0
          %285 = vst [vmem:[%s262 + $0x10] sm:$0xff] 0.0
          %286 = vst [vmem:[%s262 + $0x18] sm:$0xff] 0.0
          %287 = vst [vmem:[%s262 + $0x20] sm:$0xff] 0.0
          %288 = vst [vmem:[%s262 + $0x28] sm:$0xff] 0.0
          %289 = vst [vmem:[%s262 + $0x30] sm:$0xff] 0.0
          %290 = vst [vmem:[%s262 + $0x38] sm:$0xff] 0.0
          %291 = vst [vmem:[%s262 + $0x40] sm:$0xff] 0.0
          %292 = vst [vmem:[%s262 + $0x48] sm:$0xff] 0.0
          %293 = vst [vmem:[%s262 + $0x50] sm:$0xff] 0.0
          %294 = vst [vmem:[%s262 + $0x58] sm:$0xff] 0.0
          %295 = vst [vmem:[%s262 + $0x60] sm:$0xff] 0.0
          %296 = vst [vmem:[%s262 + $0x68] sm:$0xff] 0.0
          %297 = vst [vmem:[%s262 + $0x70] sm:$0xff] 0.0
          %298 = vst [vmem:[%s262 + $0x78] sm:$0xff] 0.0
        $region40: #{tpu_custom_call.1} parent=27 // pred_fallthru
          _
        %s299 = sadd.s32 %s27, %s29
        %s300 = smul.u32 %s299, 8
        %s301 = ssub.s32 4, %s300
        %v302 = vlaneseq
        %v303 = vshrl.u32 %v302, 7
        %v304 = vld [vmem:[%s228] sm:$0xff]
        %v305 = vld [vmem:[%s228 + $0x8] sm:$0xff]
        %v306 = vld [vmem:[%s228 + $0x10] sm:$0xff]
        %v307 = vld [vmem:[%s228 + $0x18] sm:$0xff]
        %v308 = vld [vmem:[%s237] sm:$0xff]
        %v309 = vld [vmem:[%s237 + $0x8] sm:$0xff]
        %v310 = vld [vmem:[%s237 + $0x10] sm:$0xff]
        %v311 = vld [vmem:[%s237 + $0x18] sm:$0xff]
        %v312 = vstv %s301
        %vm313 = vcmp.lt.s32.totalorder %v303, %v312
        %v318 = vcombine.low %v304, %v306
        %v319 = vcombine.high %v304, %v306
        %v320 = vcombine.low %v305, %v307
        %v321 = vcombine.high %v305, %v307
        %v326 = vsel %vm313, %v318, -10000.0
        %v327 = vsel %vm313, %v319, -10000.0
        %v328 = vsel %vm313, %v320, -10000.0
        %v329 = vsel %vm313, %v321, -10000.0
        %v334 = vcombine.low %v308, %v310
        %v335 = vcombine.high %v308, %v310
        %v336 = vcombine.low %v309, %v311
        %v337 = vcombine.high %v309, %v311
        %v342 = vsel %vm313, %v334, 0.0
        %v343 = vsel %vm313, %v335, 0.0
        %v344 = vsel %vm313, %v336, 0.0
        %v345 = vsel %vm313, %v337, 0.0
        %v346 = vand.u32 2147483647, %v326
        %v347 = vand.u32 2147483647, %v327
        %v348 = vand.u32 2147483647, %v328
        %v349 = vand.u32 2147483647, %v329
        %v350 = vsub.f32 0.0, %v346
        %v351 = vsub.f32 0.0, %v347
        %v352 = vsub.f32 0.0, %v348
        %v353 = vsub.f32 0.0, %v349
        %v354 = vmul.f32 %v350, 1.442695
        %v355 = vpow.pop %v354
        %v356 = vmul.f32 %v351, 1.442695
        %v357 = vpow.pop %v356
        %v358 = vmul.f32 %v352, 1.442695
        %v359 = vpow.pop %v358
        %v360 = vmul.f32 %v353, 1.442695
        %v361 = vpow.pop %v360
        %v362 = vmax.f32 %v326, 0.0
        %v363 = vmax.f32 %v327, 0.0
        %v364 = vmax.f32 %v328, 0.0
        %v365 = vmax.f32 %v329, 0.0
        %v366 = vmul.f32 %v326, %v342
        %v367 = vmul.f32 %v327, %v343
        %v368 = vmul.f32 %v328, %v344
        %v369 = vmul.f32 %v329, %v345
        %v370 = vsub.f32 %v362, %v366
        %v371 = vsub.f32 %v363, %v367
        %v372 = vsub.f32 %v364, %v368
        %v373 = vsub.f32 %v365, %v369
        %v374 = vadd.f32 %v355, 1.0
        %v375 = vlog2.pop %v374
        %v376 = vmul.f32 %v375, 0.6931472
        %v377 = vmul.f32 -0.5, %v355
        %v378 = vadd.f32 %v377, 1.0
        %v379 = vmul.f32 %v378, %v355
        %v380 = vand.u32 2147483647, %v355
        %vm381 = vcmp.lt.f32.partialorder %v380, 0.0004427343
        %v382 = vsel %vm381, %v379, %v376
        %v383 = vadd.f32 %v357, 1.0
        %v384 = vlog2.pop %v383
        %v385 = vmul.f32 %v384, 0.6931472
        %v386 = vmul.f32 -0.5, %v357
        %v387 = vadd.f32 %v386, 1.0
        %v388 = vmul.f32 %v387, %v357
        %v389 = vand.u32 2147483647, %v357
        %vm390 = vcmp.lt.f32.partialorder %v389, 0.0004427343
        %v391 = vsel %vm390, %v388, %v385
        %v392 = vadd.f32 %v359, 1.0
        %v393 = vlog2.pop %v392
        %v394 = vmul.f32 %v393, 0.6931472
        %v395 = vmul.f32 -0.5, %v359
        %v396 = vadd.f32 %v395, 1.0
        %v397 = vmul.f32 %v396, %v359
        %v398 = vand.u32 2147483647, %v359
        %vm399 = vcmp.lt.f32.partialorder %v398, 0.0004427343
        %v400 = vsel %vm399, %v397, %v394
        %v401 = vadd.f32 %v361, 1.0
        %v402 = vlog2.pop %v401
        %v403 = vmul.f32 %v402, 0.6931472
        %v404 = vmul.f32 -0.5, %v361
        %v405 = vadd.f32 %v404, 1.0
        %v406 = vmul.f32 %v405, %v361
        %v407 = vand.u32 2147483647, %v361
        %vm408 = vcmp.lt.f32.partialorder %v407, 0.0004427343
        %v409 = vsel %vm408, %v406, %v403
        %v410 = vadd.f32 %v370, %v382
        %v411 = vadd.f32 %v371, %v391
        %v412 = vadd.f32 %v372, %v400
        %v413 = vadd.f32 %v373, %v409
        %v414 = vadd.f32 %v355, 1.0
        %v415 = vadd.f32 %v357, 1.0
        %v416 = vadd.f32 %v359, 1.0
        %v417 = vadd.f32 %v361, 1.0
        %v418 = vrcp.pop %v414
        %v419 = vmul.f32 1.0, %v418
        %v420 = vrcp.pop %v415
        %v421 = vmul.f32 1.0, %v420
        %v422 = vrcp.pop %v416
        %v423 = vmul.f32 1.0, %v422
        %v424 = vrcp.pop %v417
        %v425 = vmul.f32 1.0, %v424
        %vm426 = vcmp.ge.f32.partialorder %v326, 0.0
        %vm427 = vcmp.ge.f32.partialorder %v327, 0.0
        %vm428 = vcmp.ge.f32.partialorder %v328, 0.0
        %vm429 = vcmp.ge.f32.partialorder %v329, 0.0
        %v430 = vmul.f32 %v355, %v419
        %v431 = vmul.f32 %v357, %v421
        %v432 = vmul.f32 %v359, %v423
        %v433 = vmul.f32 %v361, %v425
        %v434 = vsel %vm426, %v419, %v430
        %v435 = vsel %vm427, %v421, %v431
        %v436 = vsel %vm428, %v423, %v432
        %v437 = vsel %vm429, %v425, %v433
        %v438 = vadd.f32 %v410, 0.0
        %v439 = vadd.f32 %v411, 0.0
        %v440 = vadd.f32 %v412, 0.0
        %v441 = vadd.f32 %v413, 0.0
        %v442 = vadd.f32 %v438, 0.0
        %v443 = vadd.f32 %v439, 0.0
        %v444 = vadd.f32 %v440, 0.0
        %v445 = vadd.f32 %v441, 0.0
        %v446 = vmul.f32 %v434, %v342
        %v447 = vmul.f32 %v435, %v343
        %v448 = vmul.f32 %v436, %v344
        %v449 = vmul.f32 %v437, %v345
        %v450 = vadd.f32 %v446, 0.0
        %v451 = vadd.f32 %v447, 0.0
        %v452 = vadd.f32 %v448, 0.0
        %v453 = vadd.f32 %v449, 0.0
        %v454 = vadd.f32 %v450, 0.0
        %v455 = vadd.f32 %v451, 0.0
        %v456 = vadd.f32 %v452, 0.0
        %v457 = vadd.f32 %v453, 0.0
        %v458 = vadd.f32 %v434, 0.0
        %v459 = vadd.f32 %v435, 0.0
        %v460 = vadd.f32 %v436, 0.0
        %v461 = vadd.f32 %v437, 0.0
        %v462 = vadd.f32 %v458, 0.0
        %v463 = vadd.f32 %v459, 0.0
        %v464 = vadd.f32 %v460, 0.0
        %v465 = vadd.f32 %v461, 0.0
        %v466 = vadd.f32 %v342, 0.0
        %v467 = vadd.f32 %v343, 0.0
        %v468 = vadd.f32 %v344, 0.0
        %v469 = vadd.f32 %v345, 0.0
        %v470 = vadd.f32 %v466, 0.0
        %v471 = vadd.f32 %v467, 0.0
        %v472 = vadd.f32 %v468, 0.0
        %v473 = vadd.f32 %v469, 0.0
        %v474 = vld [vmem:[%s262] sm:$0xff]
        %v475 = vld [vmem:[%s262 + $0x8] sm:$0xff]
        %v476 = vld [vmem:[%s262 + $0x10] sm:$0xff]
        %v477 = vld [vmem:[%s262 + $0x18] sm:$0xff]
        %v478 = vadd.f32 %v474, %v442
        %v479 = vadd.f32 %v475, %v443
        %v480 = vadd.f32 %v476, %v444
        %v481 = vadd.f32 %v477, %v445
        %482 = vst [vmem:[%s262] sm:$0xff] %v478
        %483 = vst [vmem:[%s262 + $0x8] sm:$0xff] %v479
        %484 = vst [vmem:[%s262 + $0x10] sm:$0xff] %v480
        %485 = vst [vmem:[%s262 + $0x18] sm:$0xff] %v481
        %v486 = vld [vmem:[%s262 + $0x20] sm:$0xff]
        %v487 = vld [vmem:[%s262 + $0x28] sm:$0xff]
        %v488 = vld [vmem:[%s262 + $0x30] sm:$0xff]
        %v489 = vld [vmem:[%s262 + $0x38] sm:$0xff]
        %v490 = vadd.f32 %v486, %v454
        %v491 = vadd.f32 %v487, %v455
        %v492 = vadd.f32 %v488, %v456
        %v493 = vadd.f32 %v489, %v457
        %494 = vst [vmem:[%s262 + $0x20] sm:$0xff] %v490
        %495 = vst [vmem:[%s262 + $0x28] sm:$0xff] %v491
        %496 = vst [vmem:[%s262 + $0x30] sm:$0xff] %v492
        %497 = vst [vmem:[%s262 + $0x38] sm:$0xff] %v493
        %v498 = vld [vmem:[%s262 + $0x40] sm:$0xff]
        %v499 = vld [vmem:[%s262 + $0x48] sm:$0xff]
        %v500 = vld [vmem:[%s262 + $0x50] sm:$0xff]
        %v501 = vld [vmem:[%s262 + $0x58] sm:$0xff]
        %v502 = vadd.f32 %v498, %v462
        %v503 = vadd.f32 %v499, %v463
        %v504 = vadd.f32 %v500, %v464
        %v505 = vadd.f32 %v501, %v465
        %506 = vst [vmem:[%s262 + $0x40] sm:$0xff] %v502
        %507 = vst [vmem:[%s262 + $0x48] sm:$0xff] %v503
        %508 = vst [vmem:[%s262 + $0x50] sm:$0xff] %v504
        %509 = vst [vmem:[%s262 + $0x58] sm:$0xff] %v505
        %v510 = vld [vmem:[%s262 + $0x60] sm:$0xff]
        %v511 = vld [vmem:[%s262 + $0x68] sm:$0xff]
        %v512 = vld [vmem:[%s262 + $0x70] sm:$0xff]
        %v513 = vld [vmem:[%s262 + $0x78] sm:$0xff]
        %v514 = vadd.f32 %v510, %v470
        %v515 = vadd.f32 %v511, %v471
        %v516 = vadd.f32 %v512, %v472
        %v517 = vadd.f32 %v513, %v473
        %518 = vst [vmem:[%s262 + $0x60] sm:$0xff] %v514
        %519 = vst [vmem:[%s262 + $0x68] sm:$0xff] %v515
        %520 = vst [vmem:[%s262 + $0x70] sm:$0xff] %v516
        %521 = vst [vmem:[%s262 + $0x78] sm:$0xff] %v517
        %s522 = sand.u32 %s121, 1
        %s523 = scalar_lea.sflag [#allocation4], %s522
        %s524 = sand.u32 %s121, 1
        %s525 = smul.addr %s524, 128
        %s526 = scalar_lea.vmem [#allocation7], %s525
        // Predicated region
        $region41: #{tpu_custom_call.1} parent=27 // pred_check
          %p527 = pneg %p131
        $region42: #{tpu_custom_call.1} parent=27 // pred_check_branch
          %529 = sbr.rel (%p527) target = $region44
        $region43: #{tpu_custom_call.1} parent=27 // pred_region
          %s530 = smul.u32 %s27, 2
          %s531 = sadd.s32 %s530, %s28
          %s533 = ssub.s32 2048, 2048
          %534 = vsyncadd %s523, %s533
          %s535 = smul.addr %s531, 16
          %s536 = smul.addr %s535, 128
          %s537 = scalar_lea.hbm %s2, %s536
          %s538 = sshll.u32 %s526, 4
          %s539 = int_to_ptr.vmem [resolvable:$true] %s538
          %544 = dma.vmem_to_hbm [thread:$0]  %s539, 2048, %s537, %s523, 512, 512, 32
        $region44: #{tpu_custom_call.1} parent=27 // pred_fallthru
          _
      $region28: #{tpu_custom_call.1} parent=5 // pred_fallthru
        _
      %p545 = scmp.le.s32.totalorder 2, %s17
      // Predicated region
      $region45: #{tpu_custom_call.1} parent=5 // pred_check
        %p546 = pneg %p545
      $region46: #{tpu_custom_call.1} parent=5 // pred_check_branch
        %548 = sbr.rel (%p546) target = $region48
      $region47: #{tpu_custom_call.1} parent=5 // pred_region
        %s549 = ssub.s32 %s17, 2
        // Predicated region
        $region49: #{tpu_custom_call.1} parent=47 // pred_check
          %p550 = pneg %p137
        $region50: #{tpu_custom_call.1} parent=47 // pred_check_branch
          %552 = sbr.rel (%p550) target = $region52
        $region51: #{tpu_custom_call.1} parent=47 // pred_region
          %s553 = sand.u32 %s122, 1
          %s554 = scalar_lea.sflag [#allocation4], %s553
          %s555 = sand.u32 %s122, 1
          %s556 = smul.addr %s555, 128
          %s557 = scalar_lea.vmem [#allocation7], %s556
          %558 = dma.done %s554, 2048
        $region52: #{tpu_custom_call.1} parent=47 // pred_fallthru
          _
      $region48: #{tpu_custom_call.1} parent=5 // pred_fallthru
        _
    $region6: #{tpu_custom_call.1} parent=1 // loop_footer
      %s21 = sadd.s32 1, %s17
    $region7: #{tpu_custom_call.1} parent=1 // loop_footer_branch
      %16 = sbr.rel target = $region3
    $region8: #{tpu_custom_call.1} parent=1 // loop_exit
      _
    %559 = vsyncpa [#allocation3], 1
    %s560 = scalar_lea.sflag [#allocation3], 1
    %561 = vsyncpa %s560, 1
    %562 = vsyncpa [#allocation6], 1
    %s563 = scalar_lea.sflag [#allocation6], 1
    %564 = vsyncpa %s563, 1
    %565 = vsyncpa [#allocation4], 1
    %s566 = scalar_lea.sflag [#allocation4], 1
    %567 = vsyncpa %s566, 1

</llo_original>
